<compile_context>
chip_gen: v7x
topology: tpu7x:2x2x1
jax: 0.10.0
libtpu: 0.0.40
codegen_flags: <defaults>
</compile_context>

<pallas_src>
import functools

import jax
import jax.numpy as jnp
from jax.experimental import pallas as pl
from jax.experimental.pallas import tpu as pltpu

LANE = 128
SUBLANE_BF16 = 16


def _round_up(n, m):
    return ((n + m - 1) // m) * m


def _mlp_kernel(num_linears, *refs):
    """Fused MLP forward for one batch tile.

    refs = (x_ref, w0_ref, b0_ref, ..., w_{L-1}_ref, b_{L-1}_ref, o_ref).
    x is f32 and cast to bf16 in-kernel; weights are bf16, pre-transposed to
    (in, out) and lane-padded; biases are f32 (1, out_pad). ReLU after every
    linear except the last, matching the PyTorch forward. f32 accumulation.
    """
    x_ref = refs[0]
    o_ref = refs[-1]
    wb = refs[1:-1]

    h = x_ref[...].astype(jnp.bfloat16)            # VPU cast, hidden under DMA/MXU
    for i in range(num_linears):
        w = wb[2 * i][...]                          # bf16 (in_pad, out_pad)
        b = wb[2 * i + 1][...]                      # f32  (1, out_pad)
        acc = jnp.dot(h, w, preferred_element_type=jnp.float32) + b
        if i < num_linears - 1:
            h = jnp.maximum(acc, 0.0).astype(jnp.bfloat16)
        else:
            o_ref[...] = acc.astype(o_ref.dtype)    # lane-dense bf16 store


def _choose_batch_tiling(B, tile_b):
    """Pick (tile, padded_B) for the batch grid axis."""
    # Small batch: one full-extent block (block == array dim, so legal for any B
    # and no padding copy over x).
    if B <= 2 * SUBLANE_BF16:
        return B, B
    tile = min(tile_b, _round_up(B, SUBLANE_BF16))
    # Keep >= 2 grid steps so dimension_semantics=("parallel",) can shard the
    # batch across v7x's two TensorCores (no-op on v5e/v6e).
    tile = min(tile, _round_up((B + 1) // 2, SUBLANE_BF16))
    tile = max(tile, SUBLANE_BF16)
    return tile, _round_up(B, tile)


def mlp_forward(x, params, *, tile_b=1024):
    """Run the fused MLP Pallas kernel.

    x:      (B, num_features, 50) float32
    params: list of (W, b) with W of PyTorch shape (out, in), b of shape (out,)
    returns (B, num_classes) float32
    """
    B = x.shape[0]
    x2d = x.reshape(B, -1)                          # PyTorch x.view(B, -1); metadata-only
    in_dim = x2d.shape[1]
    num_linears = len(params)
    num_classes = params[-1][0].shape[0]

    tile, b_pad = _choose_batch_tiling(B, tile_b)
    if b_pad != B:
        x2d = jnp.pad(x2d, ((0, b_pad - B), (0, 0)))   # only when B % tile != 0

    # Weights pre-transposed to (in, out), zero-padded to lane-dense widths, bf16.
    flat_args = [x2d]
    in_specs = [pl.BlockSpec((tile, in_dim), lambda i: (i, 0))]
    resident_bytes = 0
    prev_dim = in_dim
    for (W, b) in params:
        out_dim, w_in = W.shape
        out_pad = _round_up(out_dim, LANE)
        Wt = jnp.zeros((prev_dim, out_pad), jnp.float32)
        Wt = Wt.at[:w_in, :out_dim].set(jnp.asarray(W, jnp.float32).T)
        bp = jnp.zeros((1, out_pad), jnp.float32)
        bp = bp.at[:, :out_dim].set(jnp.asarray(b, jnp.float32))
        flat_args.append(Wt.astype(jnp.bfloat16))
        flat_args.append(bp)
        # Weights/biases stay VMEM-resident across batch-grid steps.
        in_specs.append(pl.BlockSpec((prev_dim, out_pad), lambda i: (0, 0)))
        in_specs.append(pl.BlockSpec((1, out_pad), lambda i: (0, 0)))
        resident_bytes += prev_dim * out_pad * 2 + out_pad * 4
        prev_dim = out_pad

    nc_pad = prev_dim

    # VMEM budget: resident weights/biases (x2 safety margin) plus double-buffered
    # f32 x tile and bf16 out tile, plus compiler scratch headroom.
    vmem_needed = (2 * resident_bytes
                   + 2 * (tile * in_dim * 4 + tile * nc_pad * 2)
                   + (2 << 20))
    # Cap below v7x's 64 MiB physical VMEM; v5e/v6e (128 MiB) never need more here.
    # TODO(synk): if resident bf16 weights ever exceed ~40 MiB (very large
    # hidden_layer), tile the weight K/N dims instead of keeping them VMEM-resident.
    vmem_limit = int(min(max(vmem_needed, 32 << 20), 48 << 20))

    kernel = functools.partial(_mlp_kernel, num_linears)

    out = pl.pallas_call(
        kernel,
        out_shape=jax.ShapeDtypeStruct((b_pad, nc_pad), jnp.bfloat16),
        grid=(b_pad // tile,),
        in_specs=in_specs,
        out_specs=pl.BlockSpec((tile, nc_pad), lambda i: (i, 0)),
        compiler_params=pltpu.CompilerParams(
            dimension_semantics=("parallel",),
            vmem_limit_bytes=vmem_limit,
        ),
    )(*flat_args)

    return out[:B, :num_classes].astype(jnp.float32)


def init_mlp_params(key, num_features, hidden_layer, layer_num=3, num_classes=3):
    """Deterministic init mimicking nn.Linear default uniform(-1/sqrt(in), 1/sqrt(in))."""
    dims = [num_features * 50] + [hidden_layer] * layer_num + [num_classes]
    params = []
    for i in range(len(dims) - 1):
        fan_in, fan_out = dims[i], dims[i + 1]
        key, kw, kb = jax.random.split(key, 3)
        bound = 1.0 / jnp.sqrt(jnp.float32(fan_in))
        W = jax.random.uniform(kw, (fan_out, fan_in), jnp.float32, -bound, bound)
        b = jax.random.uniform(kb, (fan_out,), jnp.float32, -bound, bound)
        params.append((W, b))
    return params


def mlp_reference(x, params):
    """Pure-JAX f32 reference matching the PyTorch forward."""
    h = x.reshape(x.shape[0], -1)
    for i, (W, b) in enumerate(params):
        h = h @ W.T + b
        if i < len(params) - 1:
            h = jnp.maximum(h, 0.0)
    return h


if __name__ == "__main__":
    key = jax.random.PRNGKey(0)

    # Small shapes consistent with the module: num_features=4 -> flattened in = 200.
    B, num_features, hidden_layer, layer_num, num_classes = 2, 4, 32, 3, 3

    kx, kp = jax.random.split(key)
    x = jax.random.normal(kx, (B, num_features, 50), jnp.float32)
    params = init_mlp_params(kp, num_features, hidden_layer, layer_num, num_classes)

    out = mlp_forward(x, params)
    out = jax.block_until_ready(out)

    ref = mlp_reference(x, params)
    assert out.shape == (B, num_classes), out.shape
    # bf16 weights/activations/output with f32 accumulation -> looser tolerance
    # than the pure-f32 PyTorch reference (differences at ~1e-3 relative level).
    assert jnp.allclose(out, ref, atol=3e-2, rtol=3e-2), (out, ref)

    print("KERNEL_OK")
</pallas_src>

<mosaic_0001>
module attributes {stable_mosaic.version = 11 : i64} {
  func.func @_mlp_kernel(%arg0: i32, %arg1: memref<2x200xf32, #tpu.memory_space<vmem>>, %arg2: memref<200x128xbf16, #tpu.memory_space<vmem>>, %arg3: memref<1x128xf32, #tpu.memory_space<vmem>>, %arg4: memref<128x128xbf16, #tpu.memory_space<vmem>>, %arg5: memref<1x128xf32, #tpu.memory_space<vmem>>, %arg6: memref<128x128xbf16, #tpu.memory_space<vmem>>, %arg7: memref<1x128xf32, #tpu.memory_space<vmem>>, %arg8: memref<128x128xbf16, #tpu.memory_space<vmem>>, %arg9: memref<1x128xf32, #tpu.memory_space<vmem>>, %arg10: memref<2x128xbf16, #tpu.memory_space<vmem>>) attributes {dimension_semantics = [#tpu.dimension_semantics<parallel>], iteration_bounds = array<i64: 1>, scalar_prefetch = 0 : i64, scratch_operands = 0 : i64, tpu.core_type = #tpu.core_type<tc>, window_params = [{transform_indices = @transform_0, window_bounds = array<i64: 2, 200>}, {pipeline_mode = #tpu.pipeline_mode<synchronous>, transform_indices = @transform_1, window_bounds = array<i64: 200, 128>}, {pipeline_mode = #tpu.pipeline_mode<synchronous>, transform_indices = @transform_2, window_bounds = array<i64: 1, 128>}, {pipeline_mode = #tpu.pipeline_mode<synchronous>, transform_indices = @transform_3, window_bounds = array<i64: 128, 128>}, {pipeline_mode = #tpu.pipeline_mode<synchronous>, transform_indices = @transform_4, window_bounds = array<i64: 1, 128>}, {pipeline_mode = #tpu.pipeline_mode<synchronous>, transform_indices = @transform_5, window_bounds = array<i64: 128, 128>}, {pipeline_mode = #tpu.pipeline_mode<synchronous>, transform_indices = @transform_6, window_bounds = array<i64: 1, 128>}, {pipeline_mode = #tpu.pipeline_mode<synchronous>, transform_indices = @transform_7, window_bounds = array<i64: 128, 128>}, {pipeline_mode = #tpu.pipeline_mode<synchronous>, transform_indices = @transform_8, window_bounds = array<i64: 1, 128>}, {transform_indices = @transform_9, window_bounds = array<i64: 2, 128>}]} {
    %c0 = arith.constant 0 : index
    %c0_0 = arith.constant 0 : index
    %0 = vector.load %arg1[%c0, %c0_0] : memref<2x200xf32, #tpu.memory_space<vmem>>, vector<2x200xf32>
    %1 = arith.truncf %0 : vector<2x200xf32> to vector<2x200xbf16>
    %c0_1 = arith.constant 0 : index
    %c0_2 = arith.constant 0 : index
    %2 = vector.load %arg2[%c0_1, %c0_2] : memref<200x128xbf16, #tpu.memory_space<vmem>>, vector<200x128xbf16>
    %c0_3 = arith.constant 0 : index
    %c0_4 = arith.constant 0 : index
    %3 = vector.load %arg3[%c0_3, %c0_4] : memref<1x128xf32, #tpu.memory_space<vmem>>, vector<1x128xf32>
    %cst = arith.constant dense<0.000000e+00> : vector<2x128xf32>
    %4 = tpu.matmul %1, %2, %cst {dimension_numbers = #tpu.dot_dimension_numbers<[1], [0], [0], [1], [0, 0, 1, 1], [], []>} : vector<2x200xbf16>, vector<200x128xbf16>, vector<2x128xf32> -> vector<2x128xf32>
    %5 = vector.broadcast %3 : vector<1x128xf32> to vector<2x128xf32>
    %6 = arith.addf %4, %5 : vector<2x128xf32>
    %cst_5 = arith.constant 0.000000e+00 : f32
    %7 = vector.broadcast %cst_5 : f32 to vector<2x128xf32>
    %8 = arith.maximumf %6, %7 : vector<2x128xf32>
    %9 = arith.truncf %8 : vector<2x128xf32> to vector<2x128xbf16>
    %c0_6 = arith.constant 0 : index
    %c0_7 = arith.constant 0 : index
    %10 = vector.load %arg4[%c0_6, %c0_7] : memref<128x128xbf16, #tpu.memory_space<vmem>>, vector<128x128xbf16>
    %c0_8 = arith.constant 0 : index
    %c0_9 = arith.constant 0 : index
    %11 = vector.load %arg5[%c0_8, %c0_9] : memref<1x128xf32, #tpu.memory_space<vmem>>, vector<1x128xf32>
    %cst_10 = arith.constant dense<0.000000e+00> : vector<2x128xf32>
    %12 = tpu.matmul %9, %10, %cst_10 {dimension_numbers = #tpu.dot_dimension_numbers<[1], [0], [0], [1], [0, 0, 1, 1], [], []>} : vector<2x128xbf16>, vector<128x128xbf16>, vector<2x128xf32> -> vector<2x128xf32>
    %13 = vector.broadcast %11 : vector<1x128xf32> to vector<2x128xf32>
    %14 = arith.addf %12, %13 : vector<2x128xf32>
    %cst_11 = arith.constant 0.000000e+00 : f32
    %15 = vector.broadcast %cst_11 : f32 to vector<2x128xf32>
    %16 = arith.maximumf %14, %15 : vector<2x128xf32>
    %17 = arith.truncf %16 : vector<2x128xf32> to vector<2x128xbf16>
    %c0_12 = arith.constant 0 : index
    %c0_13 = arith.constant 0 : index
    %18 = vector.load %arg6[%c0_12, %c0_13] : memref<128x128xbf16, #tpu.memory_space<vmem>>, vector<128x128xbf16>
    %c0_14 = arith.constant 0 : index
    %c0_15 = arith.constant 0 : index
    %19 = vector.load %arg7[%c0_14, %c0_15] : memref<1x128xf32, #tpu.memory_space<vmem>>, vector<1x128xf32>
    %cst_16 = arith.constant dense<0.000000e+00> : vector<2x128xf32>
    %20 = tpu.matmul %17, %18, %cst_16 {dimension_numbers = #tpu.dot_dimension_numbers<[1], [0], [0], [1], [0, 0, 1, 1], [], []>} : vector<2x128xbf16>, vector<128x128xbf16>, vector<2x128xf32> -> vector<2x128xf32>
    %21 = vector.broadcast %19 : vector<1x128xf32> to vector<2x128xf32>
    %22 = arith.addf %20, %21 : vector<2x128xf32>
    %cst_17 = arith.constant 0.000000e+00 : f32
    %23 = vector.broadcast %cst_17 : f32 to vector<2x128xf32>
    %24 = arith.maximumf %22, %23 : vector<2x128xf32>
    %25 = arith.truncf %24 : vector<2x128xf32> to vector<2x128xbf16>
    %c0_18 = arith.constant 0 : index
    %c0_19 = arith.constant 0 : index
    %26 = vector.load %arg8[%c0_18, %c0_19] : memref<128x128xbf16, #tpu.memory_space<vmem>>, vector<128x128xbf16>
    %c0_20 = arith.constant 0 : index
    %c0_21 = arith.constant 0 : index
    %27 = vector.load %arg9[%c0_20, %c0_21] : memref<1x128xf32, #tpu.memory_space<vmem>>, vector<1x128xf32>
    %cst_22 = arith.constant dense<0.000000e+00> : vector<2x128xf32>
    %28 = tpu.matmul %25, %26, %cst_22 {dimension_numbers = #tpu.dot_dimension_numbers<[1], [0], [0], [1], [0, 0, 1, 1], [], []>} : vector<2x128xbf16>, vector<128x128xbf16>, vector<2x128xf32> -> vector<2x128xf32>
    %29 = vector.broadcast %27 : vector<1x128xf32> to vector<2x128xf32>
    %30 = arith.addf %28, %29 : vector<2x128xf32>
    %31 = arith.truncf %30 : vector<2x128xf32> to vector<2x128xbf16>
    %c0_23 = arith.constant 0 : index
    %c0_24 = arith.constant 0 : index
    %32 = vector.load %arg10[%c0_23, %c0_24] : memref<2x128xbf16, #tpu.memory_space<vmem>>, vector<2x128xbf16>
    tpu.vector_store %arg10[%c0_23, %c0_24], %31 {strides = array<i32>} : memref<2x128xbf16, #tpu.memory_space<vmem>>, vector<2x128xbf16>,
    return
  }
  func.func @transform_0(%arg0: i32) -> (i32, i32) {
    %c0_i32 = arith.constant 0 : i32
    %c0_i32_0 = arith.constant 0 : i32
    return %arg0, %c0_i32 : i32, i32
  }
  func.func @transform_1(%arg0: i32) -> (i32, i32) {
    %c0_i32 = arith.constant 0 : i32
    %c0_i32_0 = arith.constant 0 : i32
    %c0_i32_1 = arith.constant 0 : i32
    return %c0_i32, %c0_i32_0 : i32, i32
  }
  func.func @transform_2(%arg0: i32) -> (i32, i32) {
    %c0_i32 = arith.constant 0 : i32
    %c0_i32_0 = arith.constant 0 : i32
    %c0_i32_1 = arith.constant 0 : i32
    return %c0_i32, %c0_i32_0 : i32, i32
  }
  func.func @transform_3(%arg0: i32) -> (i32, i32) {
    %c0_i32 = arith.constant 0 : i32
    %c0_i32_0 = arith.constant 0 : i32
    %c0_i32_1 = arith.constant 0 : i32
    return %c0_i32, %c0_i32_0 : i32, i32
  }
  func.func @transform_4(%arg0: i32) -> (i32, i32) {
    %c0_i32 = arith.constant 0 : i32
    %c0_i32_0 = arith.constant 0 : i32
    %c0_i32_1 = arith.constant 0 : i32
    return %c0_i32, %c0_i32_0 : i32, i32
  }
  func.func @transform_5(%arg0: i32) -> (i32, i32) {
    %c0_i32 = arith.constant 0 : i32
    %c0_i32_0 = arith.constant 0 : i32
    %c0_i32_1 = arith.constant 0 : i32
    return %c0_i32, %c0_i32_0 : i32, i32
  }
  func.func @transform_6(%arg0: i32) -> (i32, i32) {
    %c0_i32 = arith.constant 0 : i32
    %c0_i32_0 = arith.constant 0 : i32
    %c0_i32_1 = arith.constant 0 : i32
    return %c0_i32, %c0_i32_0 : i32, i32
  }
  func.func @transform_7(%arg0: i32) -> (i32, i32) {
    %c0_i32 = arith.constant 0 : i32
    %c0_i32_0 = arith.constant 0 : i32
    %c0_i32_1 = arith.constant 0 : i32
    return %c0_i32, %c0_i32_0 : i32, i32
  }
  func.func @transform_8(%arg0: i32) -> (i32, i32) {
    %c0_i32 = arith.constant 0 : i32
    %c0_i32_0 = arith.constant 0 : i32
    %c0_i32_1 = arith.constant 0 : i32
    return %c0_i32, %c0_i32_0 : i32, i32
  }
  func.func @transform_9(%arg0: i32) -> (i32, i32) {
    %c0_i32 = arith.constant 0 : i32
    %c0_i32_0 = arith.constant 0 : i32
    return %arg0, %c0_i32 : i32, i32
  }
}

</mosaic_0001>

<llo_original>
// kernel: tpu_custom_call.1
$region0: #{tpu_custom_call.1}
  #allocation0 [shape = 'u32[]', space=smem, size = 0x4, offset = 0x4, fixed_abs, tag = 'smem constant byte address 0x4 - core index']
  #allocation1 [shape = 'u32[144,128]{1,0:T(1,128)}', space=vmem, size = 0x12000, scoped, tag = 'internal scratch']
  %s0 = inlined_call_operand.hbm [shape: f32[2,200], index: 0, kind: input, shape index: {}]
  %s1 = inlined_call_operand.hbm [shape: bf16[200,128], index: 1, kind: input, shape index: {}]
  %s2 = inlined_call_operand.vmem [shape: f32[1,128], index: 2, kind: input, shape index: {}]
  %s3 = inlined_call_operand.hbm [shape: bf16[128,128], index: 3, kind: input, shape index: {}]
  %s4 = inlined_call_operand.vmem [shape: f32[1,128], index: 4, kind: input, shape index: {}]
  %s5 = inlined_call_operand.hbm [shape: bf16[128,128], index: 5, kind: input, shape index: {}]
  %s6 = inlined_call_operand.vmem [shape: f32[1,128], index: 6, kind: input, shape index: {}]
  %s7 = inlined_call_operand.hbm [shape: bf16[128,128], index: 7, kind: input, shape index: {}]
  %s8 = inlined_call_operand.vmem [shape: f32[1,128], index: 8, kind: input, shape index: {}]
  %s9 = inlined_call_operand.hbm [shape: bf16[2,128], index: 9, kind: output, shape index: {}]
  %s10 = sld [smem:[#allocation0]]
  $region66: #{tpu_custom_call.1} parent=0
    _
  %s12 = ssub.s32 1, %s10
  %s13 = scalar_select 0, %s12, %s10
  $region1: #{tpu_custom_call.1} parent=0
    #allocation2 [shape = 'u8[2048]{0}', space=vmem, size = 0x800, scoped, tag = 'input window, operand 0, single buffered']
    #allocation3 [shape = 's32[1]{0}', space=sflag, size = 0x4, scoped, tag = 'scoped memory for tpu_custom_call.1']
    #allocation4 [shape = 's32[1]{0}', space=sflag, size = 0x4, scoped, tag = 'scoped memory for tpu_custom_call.1']
    #allocation5 [shape = 'u8[51200]{0}', space=vmem, size = 0xc800, scoped, tag = 'input window, operand 1, single buffered']
    #allocation6 [shape = 's32[1]{0}', space=sflag, size = 0x4, scoped, tag = 'scoped memory for tpu_custom_call.1']
    #allocation7 [shape = 'u8[32768]{0}', space=vmem, size = 0x8000, scoped, tag = 'input window, operand 3, single buffered']
    #allocation8 [shape = 'u8[32768]{0}', space=vmem, size = 0x8000, scoped, tag = 'input window, operand 5, single buffered']
    #allocation9 [shape = 's32[1]{0}', space=sflag, size = 0x4, scoped, tag = 'scoped memory for tpu_custom_call.1']
    #allocation10 [shape = 'u8[32768]{0}', space=vmem, size = 0x8000, scoped, tag = 'input window, operand 7, single buffered']
    #allocation11 [shape = 'u8[512]{0}', space=vmem, size = 0x400, scoped, tag = 'output window, operand 0, single buffered']
    %14 = vsyncpa [#allocation3], 0
    %15 = vsyncpa [#allocation6], 0
    %16 = vsyncpa [#allocation9], 0
    %17 = vsyncpa [#allocation4], 0
    // Predicated region
    $region2: #{tpu_custom_call.1} parent=1 // pred_check
      _
    $region3: #{tpu_custom_call.1} parent=1 // pred_check_branch
      %19 = sbr.rel (0) target = $region5
    $region4: #{tpu_custom_call.1} parent=1 // pred_region
      %s21 = ssub.s32 64, 64
      %22 = vsyncadd [#allocation3], %s21
      %s24 = sshll.u32 [#allocation2], 4
      %s25 = int_to_ptr.vmem [resolvable:$true] %s24
      %27 = dma.hbm_to_vmem [thread:$0]  %s0, 64, %s25, [#allocation3]
    $region5: #{tpu_custom_call.1} parent=1 // pred_fallthru
      _
    // Predicated region
    $region6: #{tpu_custom_call.1} parent=1 // pred_check
      _
    $region7: #{tpu_custom_call.1} parent=1 // pred_check_branch
      %29 = sbr.rel (0) target = $region9
    $region8: #{tpu_custom_call.1} parent=1 // pred_region
      %s31 = ssub.s32 1600, 1600
      %32 = vsyncadd [#allocation6], %s31
      %s33 = sshll.u32 [#allocation5], 4
      %s34 = int_to_ptr.vmem [resolvable:$true] %s33
      %39 = dma.hbm_to_vmem [thread:$0]  %s1, 1600, %s34, [#allocation6], 64, 64, 4
    $region9: #{tpu_custom_call.1} parent=1 // pred_fallthru
      _
    // Predicated region
    $region10: #{tpu_custom_call.1} parent=1 // pred_check
      _
    $region11: #{tpu_custom_call.1} parent=1 // pred_check_branch
      %41 = sbr.rel (0) target = $region13
    $region12: #{tpu_custom_call.1} parent=1 // pred_region
      _
    $region13: #{tpu_custom_call.1} parent=1 // pred_fallthru
      _
    // Predicated region
    $region14: #{tpu_custom_call.1} parent=1 // pred_check
      _
    $region15: #{tpu_custom_call.1} parent=1 // pred_check_branch
      %43 = sbr.rel (0) target = $region17
    $region16: #{tpu_custom_call.1} parent=1 // pred_region
      %s45 = ssub.s32 1024, 1024
      %46 = vsyncadd [#allocation6], %s45
      %s47 = sshll.u32 [#allocation7], 4
      %s48 = int_to_ptr.vmem [resolvable:$true] %s47
      %53 = dma.hbm_to_vmem [thread:$0]  %s3, 1024, %s48, [#allocation6], 64, 64, 4
    $region17: #{tpu_custom_call.1} parent=1 // pred_fallthru
      _
    // Predicated region
    $region18: #{tpu_custom_call.1} parent=1 // pred_check
      _
    $region19: #{tpu_custom_call.1} parent=1 // pred_check_branch
      %55 = sbr.rel (0) target = $region21
    $region20: #{tpu_custom_call.1} parent=1 // pred_region
      _
    $region21: #{tpu_custom_call.1} parent=1 // pred_fallthru
      _
    // Predicated region
    $region22: #{tpu_custom_call.1} parent=1 // pred_check
      _
    $region23: #{tpu_custom_call.1} parent=1 // pred_check_branch
      %57 = sbr.rel (0) target = $region25
    $region24: #{tpu_custom_call.1} parent=1 // pred_region
      %s59 = ssub.s32 1024, 1024
      %60 = vsyncadd [#allocation9], %s59
      %s61 = sshll.u32 [#allocation8], 4
      %s62 = int_to_ptr.vmem [resolvable:$true] %s61
      %67 = dma.hbm_to_vmem [thread:$0]  %s5, 1024, %s62, [#allocation9], 64, 64, 4
    $region25: #{tpu_custom_call.1} parent=1 // pred_fallthru
      _
    // Predicated region
    $region26: #{tpu_custom_call.1} parent=1 // pred_check
      _
    $region27: #{tpu_custom_call.1} parent=1 // pred_check_branch
      %69 = sbr.rel (0) target = $region29
    $region28: #{tpu_custom_call.1} parent=1 // pred_region
      _
    $region29: #{tpu_custom_call.1} parent=1 // pred_fallthru
      _
    // Predicated region
    $region30: #{tpu_custom_call.1} parent=1 // pred_check
      _
    $region31: #{tpu_custom_call.1} parent=1 // pred_check_branch
      %71 = sbr.rel (0) target = $region33
    $region32: #{tpu_custom_call.1} parent=1 // pred_region
      %s73 = ssub.s32 1024, 1024
      %74 = vsyncadd [#allocation9], %s73
      %s75 = sshll.u32 [#allocation10], 4
      %s76 = int_to_ptr.vmem [resolvable:$true] %s75
      %81 = dma.hbm_to_vmem [thread:$0]  %s7, 1024, %s76, [#allocation9], 64, 64, 4
    $region33: #{tpu_custom_call.1} parent=1 // pred_fallthru
      _
    // Predicated region
    $region34: #{tpu_custom_call.1} parent=1 // pred_check
      _
    $region35: #{tpu_custom_call.1} parent=1 // pred_check_branch
      %83 = sbr.rel (0) target = $region37
    $region36: #{tpu_custom_call.1} parent=1 // pred_region
      _
    $region37: #{tpu_custom_call.1} parent=1 // pred_fallthru
      _
    // Predicated region
    $region38: #{tpu_custom_call.1} parent=1 // pred_check
      _
    $region39: #{tpu_custom_call.1} parent=1 // pred_check_branch
      %85 = sbr.rel (0) target = $region41
    $region40: #{tpu_custom_call.1} parent=1 // pred_region
      %86 = dma.done [#allocation3], 64
    $region41: #{tpu_custom_call.1} parent=1 // pred_fallthru
      _
    // Predicated region
    $region42: #{tpu_custom_call.1} parent=1 // pred_check
      _
    $region43: #{tpu_custom_call.1} parent=1 // pred_check_branch
      %88 = sbr.rel (0) target = $region45
    $region44: #{tpu_custom_call.1} parent=1 // pred_region
      %89 = dma.done [#allocation6], 1600
    $region45: #{tpu_custom_call.1} parent=1 // pred_fallthru
      _
    // Predicated region
    $region46: #{tpu_custom_call.1} parent=1 // pred_check
      _
    $region47: #{tpu_custom_call.1} parent=1 // pred_check_branch
      %91 = sbr.rel (0) target = $region49
    $region48: #{tpu_custom_call.1} parent=1 // pred_region
      %92 = dma.done [#allocation6], 1024
    $region49: #{tpu_custom_call.1} parent=1 // pred_fallthru
      _
    // Predicated region
    $region50: #{tpu_custom_call.1} parent=1 // pred_check
      _
    $region51: #{tpu_custom_call.1} parent=1 // pred_check_branch
      %94 = sbr.rel (0) target = $region53
    $region52: #{tpu_custom_call.1} parent=1 // pred_region
      %95 = dma.done [#allocation9], 1024
    $region53: #{tpu_custom_call.1} parent=1 // pred_fallthru
      _
    // Predicated region
    $region54: #{tpu_custom_call.1} parent=1 // pred_check
      _
    $region55: #{tpu_custom_call.1} parent=1 // pred_check_branch
      %97 = sbr.rel (0) target = $region57
    $region56: #{tpu_custom_call.1} parent=1 // pred_region
      %98 = dma.done [#allocation9], 1024
    $region57: #{tpu_custom_call.1} parent=1 // pred_fallthru
      _
    %v100 = vld [vmem:[#allocation2] sm:$0xf]
    %v103 = vunpack.c.l.s4 1983009808
    %v104 = vunpack.c.0.s8 %v103
    %v105 = vlaneseq
    %v106 = vshrl.u32 %v105, 7
    %v107 = vsub.s32 %v104, %v106
    %v108 = vrot.slane %v100, %v107
    %v109 = vcombine.high %v108, %v108
    %v112 = vpack.c.bf16 %v108, %v108
    %v113 = vpack.c.bf16 %v109, %v109
    %v114 = vld [vmem:[#allocation5] sm:$0xf]
    %v115 = vld [vmem:[#allocation5 + $0x4] sm:$0xf]
    %v116 = vld [vmem:[#allocation5 + $0x8] sm:$0xf]
    %v117 = vld [vmem:[#allocation5 + $0xc] sm:$0xf]
    %v118 = vld [vmem:[#allocation5 + $0x10] sm:$0xf]
    %v119 = vld [vmem:[#allocation5 + $0x14] sm:$0xf]
    %v120 = vld [vmem:[#allocation5 + $0x18] sm:$0xf]
    %v121 = vld [vmem:[#allocation5 + $0x1c] sm:$0xf]
    %v122 = vld [vmem:[#allocation5 + $0x20] sm:$0xf]
    %v123 = vld [vmem:[#allocation5 + $0x24] sm:$0xf]
    %v124 = vld [vmem:[#allocation5 + $0x28] sm:$0xf]
    %v125 = vld [vmem:[#allocation5 + $0x2c] sm:$0xf]
    %v126 = vld [vmem:[#allocation5 + $0x30] sm:$0xf]
    %v127 = vld [vmem:[#allocation5 + $0x34] sm:$0xf]
    %v128 = vld [vmem:[#allocation5 + $0x38] sm:$0xf]
    %v129 = vld [vmem:[#allocation5 + $0x3c] sm:$0xf]
    %v130 = vld [vmem:[#allocation5 + $0x40] sm:$0xf]
    %v131 = vld [vmem:[#allocation5 + $0x44] sm:$0xf]
    %v132 = vld [vmem:[#allocation5 + $0x48] sm:$0xf]
    %v133 = vld [vmem:[#allocation5 + $0x4c] sm:$0xf]
    %v134 = vld [vmem:[#allocation5 + $0x50] sm:$0xf]
    %v135 = vld [vmem:[#allocation5 + $0x54] sm:$0xf]
    %v136 = vld [vmem:[#allocation5 + $0x58] sm:$0xf]
    %v137 = vld [vmem:[#allocation5 + $0x5c] sm:$0xf]
    %v138 = vld [vmem:[#allocation5 + $0x60] sm:$0xf]
    %v139 = vld [vmem:[%s2] sm:$0x1]
    %v141 = vlaneseq
    %v142 = vshrl.u32 %v141, 7
    %v143 = vsub.s32 0, %v142
    %v144 = vrot.slane %v139, %v143
    %v171 = vunpack.c.l.b16 %v114
    %v172 = vunpack.c.l.b16 %v115
    %v173 = vunpack.c.l.b16 %v116
    %v174 = vunpack.c.l.b16 %v117
    %v175 = vunpack.c.l.b16 %v118
    %v176 = vunpack.c.l.b16 %v119
    %v177 = vunpack.c.l.b16 %v120
    %v178 = vunpack.c.l.b16 %v121
    %v179 = vunpack.c.l.b16 %v122
    %v180 = vunpack.c.l.b16 %v123
    %v181 = vunpack.c.l.b16 %v124
    %v182 = vunpack.c.l.b16 %v125
    %v183 = vunpack.c.l.b16 %v126
    %v184 = vunpack.c.l.b16 %v127
    %v185 = vunpack.c.l.b16 %v128
    %v186 = vunpack.c.l.b16 %v129
    %v187 = vunpack.c.l.b16 %v130
    %v188 = vunpack.c.l.b16 %v131
    %v189 = vunpack.c.l.b16 %v132
    %v190 = vunpack.c.l.b16 %v133
    %v191 = vunpack.c.l.b16 %v134
    %v192 = vunpack.c.l.b16 %v135
    %v193 = vunpack.c.l.b16 %v136
    %v194 = vunpack.c.l.b16 %v137
    %v195 = vunpack.c.l.b16 %v138
    %v196 = vpack.c.b16 %v172, %v171
    %v197 = vpack.c.b16 %v174, %v173
    %v198 = vpack.c.b16 %v176, %v175
    %v199 = vpack.c.b16 %v178, %v177
    %v200 = vpack.c.b16 %v180, %v179
    %v201 = vpack.c.b16 %v182, %v181
    %v202 = vpack.c.b16 %v184, %v183
    %v203 = vpack.c.b16 %v186, %v185
    %v204 = vpack.c.b16 %v188, %v187
    %v205 = vpack.c.b16 %v190, %v189
    %v206 = vpack.c.b16 %v192, %v191
    %v207 = vpack.c.b16 %v194, %v193
    %v208 = vpack.c.b16 %v195, %v195
    %vm221 = vcmask 588800
    %v223 = vsel %vm221, %v113, 0
    %vm225 = vcmask 1043456
    %v227 = vsel %vm225, %v208, 0
    %229 = vmatprep.subr.bf16.mxu0 0
    %230 = vmatpush1.bf16.msra.mxu0 %v196
    %231 = vmatprep.subr.bf16.mxu0 0
    %232 = vmatpush1.bf16.msra.mxu0 %v197
    %233 = vmatprep.subr.bf16.mxu0 0
    %234 = vmatpush1.bf16.msra.mxu0 %v198
    %235 = vmatprep.subr.bf16.mxu0 0
    %236 = vmatpush1.bf16.msra.mxu0 %v199
    %237 = vmatprep.subr.bf16.mxu0 0
    %238 = vmatpush1.bf16.msra.mxu0 %v200
    %239 = vmatprep.subr.bf16.mxu0 0
    %240 = vmatpush1.bf16.msra.mxu0 %v201
    %241 = vmatprep.subr.bf16.mxu0 0
    %242 = vmatpush1.bf16.msra.mxu0 %v202
    %243 = vmatprep.subr.bf16.mxu0 0
    %244 = vmatpush1.bf16.msra.mxu0 %v203
    %245 = vmatprep.subr.bf16.mxu0 0
    %246 = vmatpush1.bf16.msra.mxu0 %v204
    %247 = vmatprep.subr.bf16.mxu0 0
    %248 = vmatpush1.bf16.msra.mxu0 %v205
    %249 = vmatprep.subr.bf16.mxu0 0
    %250 = vmatpush1.bf16.msra.mxu0 %v206
    %251 = vmatprep.subr.bf16.mxu0 0
    %252 = vmatpush1.bf16.msra.mxu0 %v207
    %253 = vmatprep.subr.bf16.mxu0 0
    %254 = vmatpush1.bf16.msra.mxu0 %v227
    %255 = vmatprep.subr.bf16.mxu0 0
    %256 = vmatpush1.bf16.msra.mxu0 0
    %257 = vmatprep.subr.bf16.mxu0 0
    %258 = vmatpush1.bf16.msra.mxu0 0
    %259 = vmatprep.subr.bf16.mxu0 0
    %260 = vmatpush1.bf16.msra.mxu0 0
    %261 = vmatprep.mubr.bf16.mxu0 %v223
    %262 = vmatmul.mubr.bf16.gmra.mrb[0].mxu0 %v112
    %v263 = vpop.f32.mrb[0].mxu0
    %v264 = vadd.f32 %v144, %v263
    %v265 = vpop.f32.mrb[0].mxu0
    %v266 = vpop.f32.mrb[0].mxu0
    %v267 = vpop.f32.mrb[0].mxu0
    %268 = vdwg.mxu0
    %v269 = vmax.f32 %v264, 0.0
    %v270 = vpack.c.bf16 %v269, %v269
    %v271 = vld [vmem:[#allocation7] sm:$0xf]
    %v272 = vld [vmem:[#allocation7 + $0x4] sm:$0xf]
    %v273 = vld [vmem:[#allocation7 + $0x8] sm:$0xf]
    %v274 = vld [vmem:[#allocation7 + $0xc] sm:$0xf]
    %v275 = vld [vmem:[#allocation7 + $0x10] sm:$0xf]
    %v276 = vld [vmem:[#allocation7 + $0x14] sm:$0xf]
    %v277 = vld [vmem:[#allocation7 + $0x18] sm:$0xf]
    %v278 = vld [vmem:[#allocation7 + $0x1c] sm:$0xf]
    %v279 = vld [vmem:[#allocation7 + $0x20] sm:$0xf]
    %v280 = vld [vmem:[#allocation7 + $0x24] sm:$0xf]
    %v281 = vld [vmem:[#allocation7 + $0x28] sm:$0xf]
    %v282 = vld [vmem:[#allocation7 + $0x2c] sm:$0xf]
    %v283 = vld [vmem:[#allocation7 + $0x30] sm:$0xf]
    %v284 = vld [vmem:[#allocation7 + $0x34] sm:$0xf]
    %v285 = vld [vmem:[#allocation7 + $0x38] sm:$0xf]
    %v286 = vld [vmem:[#allocation7 + $0x3c] sm:$0xf]
    %v287 = vld [vmem:[%s4] sm:$0x1]
    %v289 = vlaneseq
    %v290 = vshrl.u32 %v289, 7
    %v291 = vsub.s32 0, %v290
    %v292 = vrot.slane %v287, %v291
    %v310 = vunpack.c.l.b16 %v271
    %v311 = vunpack.c.l.b16 %v272
    %v312 = vunpack.c.l.b16 %v273
    %v313 = vunpack.c.l.b16 %v274
    %v314 = vunpack.c.l.b16 %v275
    %v315 = vunpack.c.l.b16 %v276
    %v316 = vunpack.c.l.b16 %v277
    %v317 = vunpack.c.l.b16 %v278
    %v318 = vunpack.c.l.b16 %v279
    %v319 = vunpack.c.l.b16 %v280
    %v320 = vunpack.c.l.b16 %v281
    %v321 = vunpack.c.l.b16 %v282
    %v322 = vunpack.c.l.b16 %v283
    %v323 = vunpack.c.l.b16 %v284
    %v324 = vunpack.c.l.b16 %v285
    %v325 = vunpack.c.l.b16 %v286
    %v326 = vpack.c.b16 %v311, %v310
    %v327 = vpack.c.b16 %v313, %v312
    %v328 = vpack.c.b16 %v315, %v314
    %v329 = vpack.c.b16 %v317, %v316
    %v330 = vpack.c.b16 %v319, %v318
    %v331 = vpack.c.b16 %v321, %v320
    %v332 = vpack.c.b16 %v323, %v322
    %v333 = vpack.c.b16 %v325, %v324
    %342 = vmatprep.subr.bf16.mxu0 0
    %343 = vmatpush1.bf16.msra.mxu0 %v326
    %344 = vmatprep.subr.bf16.mxu0 0
    %345 = vmatpush1.bf16.msra.mxu0 %v327
    %346 = vmatprep.subr.bf16.mxu0 0
    %347 = vmatpush1.bf16.msra.mxu0 %v328
    %348 = vmatprep.subr.bf16.mxu0 0
    %349 = vmatpush1.bf16.msra.mxu0 %v329
    %350 = vmatprep.subr.bf16.mxu0 0
    %351 = vmatpush1.bf16.msra.mxu0 %v330
    %352 = vmatprep.subr.bf16.mxu0 0
    %353 = vmatpush1.bf16.msra.mxu0 %v331
    %354 = vmatprep.subr.bf16.mxu0 0
    %355 = vmatpush1.bf16.msra.mxu0 %v332
    %356 = vmatprep.subr.bf16.mxu0 0
    %357 = vmatpush1.bf16.msra.mxu0 %v333
    %358 = vmatprep.subr.bf16.mxu0 0
    %359 = vmatpush1.bf16.msra.mxu0 0
    %360 = vmatprep.subr.bf16.mxu0 0
    %361 = vmatpush1.bf16.msra.mxu0 0
    %362 = vmatprep.subr.bf16.mxu0 0
    %363 = vmatpush1.bf16.msra.mxu0 0
    %364 = vmatprep.subr.bf16.mxu0 0
    %365 = vmatpush1.bf16.msra.mxu0 0
    %366 = vmatprep.subr.bf16.mxu0 0
    %367 = vmatpush1.bf16.msra.mxu0 0
    %368 = vmatprep.subr.bf16.mxu0 0
    %369 = vmatpush1.bf16.msra.mxu0 0
    %370 = vmatprep.subr.bf16.mxu0 0
    %371 = vmatpush1.bf16.msra.mxu0 0
    %372 = vmatprep.subr.bf16.mxu0 0
    %373 = vmatpush1.bf16.msra.mxu0 0
    %374 = vmatprep.mubr.bf16.mxu0 0
    %375 = vmatmul.mubr.bf16.gmra.mrb[0].mxu0 %v270
    %v376 = vpop.f32.mrb[0].mxu0
    %v377 = vadd.f32 %v292, %v376
    %v378 = vpop.f32.mrb[0].mxu0
    %v379 = vpop.f32.mrb[0].mxu0
    %v380 = vpop.f32.mrb[0].mxu0
    %381 = vdwg.mxu0
    %v382 = vmax.f32 %v377, 0.0
    %v383 = vpack.c.bf16 %v382, %v382
    %v384 = vld [vmem:[#allocation8] sm:$0xf]
    %v385 = vld [vmem:[#allocation8 + $0x4] sm:$0xf]
    %v386 = vld [vmem:[#allocation8 + $0x8] sm:$0xf]
    %v387 = vld [vmem:[#allocation8 + $0xc] sm:$0xf]
    %v388 = vld [vmem:[#allocation8 + $0x10] sm:$0xf]
    %v389 = vld [vmem:[#allocation8 + $0x14] sm:$0xf]
    %v390 = vld [vmem:[#allocation8 + $0x18] sm:$0xf]
    %v391 = vld [vmem:[#allocation8 + $0x1c] sm:$0xf]
    %v392 = vld [vmem:[#allocation8 + $0x20] sm:$0xf]
    %v393 = vld [vmem:[#allocation8 + $0x24] sm:$0xf]
    %v394 = vld [vmem:[#allocation8 + $0x28] sm:$0xf]
    %v395 = vld [vmem:[#allocation8 + $0x2c] sm:$0xf]
    %v396 = vld [vmem:[#allocation8 + $0x30] sm:$0xf]
    %v397 = vld [vmem:[#allocation8 + $0x34] sm:$0xf]
    %v398 = vld [vmem:[#allocation8 + $0x38] sm:$0xf]
    %v399 = vld [vmem:[#allocation8 + $0x3c] sm:$0xf]
    %v400 = vld [vmem:[%s6] sm:$0x1]
    %v402 = vlaneseq
    %v403 = vshrl.u32 %v402, 7
    %v404 = vsub.s32 0, %v403
    %v405 = vrot.slane %v400, %v404
    %v423 = vunpack.c.l.b16 %v384
    %v424 = vunpack.c.l.b16 %v385
    %v425 = vunpack.c.l.b16 %v386
    %v426 = vunpack.c.l.b16 %v387
    %v427 = vunpack.c.l.b16 %v388
    %v428 = vunpack.c.l.b16 %v389
    %v429 = vunpack.c.l.b16 %v390
    %v430 = vunpack.c.l.b16 %v391
    %v431 = vunpack.c.l.b16 %v392
    %v432 = vunpack.c.l.b16 %v393
    %v433 = vunpack.c.l.b16 %v394
    %v434 = vunpack.c.l.b16 %v395
    %v435 = vunpack.c.l.b16 %v396
    %v436 = vunpack.c.l.b16 %v397
    %v437 = vunpack.c.l.b16 %v398
    %v438 = vunpack.c.l.b16 %v399
    %v439 = vpack.c.b16 %v424, %v423
    %v440 = vpack.c.b16 %v426, %v425
    %v441 = vpack.c.b16 %v428, %v427
    %v442 = vpack.c.b16 %v430, %v429
    %v443 = vpack.c.b16 %v432, %v431
    %v444 = vpack.c.b16 %v434, %v433
    %v445 = vpack.c.b16 %v436, %v435
    %v446 = vpack.c.b16 %v438, %v437
    %455 = vmatprep.subr.bf16.mxu0 0
    %456 = vmatpush1.bf16.msra.mxu0 %v439
    %457 = vmatprep.subr.bf16.mxu0 0
    %458 = vmatpush1.bf16.msra.mxu0 %v440
    %459 = vmatprep.subr.bf16.mxu0 0
    %460 = vmatpush1.bf16.msra.mxu0 %v441
    %461 = vmatprep.subr.bf16.mxu0 0
    %462 = vmatpush1.bf16.msra.mxu0 %v442
    %463 = vmatprep.subr.bf16.mxu0 0
    %464 = vmatpush1.bf16.msra.mxu0 %v443
    %465 = vmatprep.subr.bf16.mxu0 0
    %466 = vmatpush1.bf16.msra.mxu0 %v444
    %467 = vmatprep.subr.bf16.mxu0 0
    %468 = vmatpush1.bf16.msra.mxu0 %v445
    %469 = vmatprep.subr.bf16.mxu0 0
    %470 = vmatpush1.bf16.msra.mxu0 %v446
    %471 = vmatprep.subr.bf16.mxu0 0
    %472 = vmatpush1.bf16.msra.mxu0 0
    %473 = vmatprep.subr.bf16.mxu0 0
    %474 = vmatpush1.bf16.msra.mxu0 0
    %475 = vmatprep.subr.bf16.mxu0 0
    %476 = vmatpush1.bf16.msra.mxu0 0
    %477 = vmatprep.subr.bf16.mxu0 0
    %478 = vmatpush1.bf16.msra.mxu0 0
    %479 = vmatprep.subr.bf16.mxu0 0
    %480 = vmatpush1.bf16.msra.mxu0 0
    %481 = vmatprep.subr.bf16.mxu0 0
    %482 = vmatpush1.bf16.msra.mxu0 0
    %483 = vmatprep.subr.bf16.mxu0 0
    %484 = vmatpush1.bf16.msra.mxu0 0
    %485 = vmatprep.subr.bf16.mxu0 0
    %486 = vmatpush1.bf16.msra.mxu0 0
    %487 = vmatprep.mubr.bf16.mxu0 0
    %488 = vmatmul.mubr.bf16.gmra.mrb[0].mxu0 %v383
    %v489 = vpop.f32.mrb[0].mxu0
    %v490 = vadd.f32 %v405, %v489
    %v491 = vpop.f32.mrb[0].mxu0
    %v492 = vpop.f32.mrb[0].mxu0
    %v493 = vpop.f32.mrb[0].mxu0
    %494 = vdwg.mxu0
    %v495 = vmax.f32 %v490, 0.0
    %v496 = vpack.c.bf16 %v495, %v495
    %v497 = vld [vmem:[#allocation10] sm:$0xf]
    %v498 = vld [vmem:[#allocation10 + $0x4] sm:$0xf]
    %v499 = vld [vmem:[#allocation10 + $0x8] sm:$0xf]
    %v500 = vld [vmem:[#allocation10 + $0xc] sm:$0xf]
    %v501 = vld [vmem:[#allocation10 + $0x10] sm:$0xf]
    %v502 = vld [vmem:[#allocation10 + $0x14] sm:$0xf]
    %v503 = vld [vmem:[#allocation10 + $0x18] sm:$0xf]
    %v504 = vld [vmem:[#allocation10 + $0x1c] sm:$0xf]
    %v505 = vld [vmem:[#allocation10 + $0x20] sm:$0xf]
    %v506 = vld [vmem:[#allocation10 + $0x24] sm:$0xf]
    %v507 = vld [vmem:[#allocation10 + $0x28] sm:$0xf]
    %v508 = vld [vmem:[#allocation10 + $0x2c] sm:$0xf]
    %v509 = vld [vmem:[#allocation10 + $0x30] sm:$0xf]
    %v510 = vld [vmem:[#allocation10 + $0x34] sm:$0xf]
    %v511 = vld [vmem:[#allocation10 + $0x38] sm:$0xf]
    %v512 = vld [vmem:[#allocation10 + $0x3c] sm:$0xf]
    %v513 = vld [vmem:[%s8] sm:$0x1]
    %v515 = vlaneseq
    %v516 = vshrl.u32 %v515, 7
    %v517 = vsub.s32 0, %v516
    %v518 = vrot.slane %v513, %v517
    %v536 = vunpack.c.l.b16 %v497
    %v537 = vunpack.c.l.b16 %v498
    %v538 = vunpack.c.l.b16 %v499
    %v539 = vunpack.c.l.b16 %v500
    %v540 = vunpack.c.l.b16 %v501
    %v541 = vunpack.c.l.b16 %v502
    %v542 = vunpack.c.l.b16 %v503
    %v543 = vunpack.c.l.b16 %v504
    %v544 = vunpack.c.l.b16 %v505
    %v545 = vunpack.c.l.b16 %v506
    %v546 = vunpack.c.l.b16 %v507
    %v547 = vunpack.c.l.b16 %v508
    %v548 = vunpack.c.l.b16 %v509
    %v549 = vunpack.c.l.b16 %v510
    %v550 = vunpack.c.l.b16 %v511
    %v551 = vunpack.c.l.b16 %v512
    %v552 = vpack.c.b16 %v537, %v536
    %v553 = vpack.c.b16 %v539, %v538
    %v554 = vpack.c.b16 %v541, %v540
    %v555 = vpack.c.b16 %v543, %v542
    %v556 = vpack.c.b16 %v545, %v544
    %v557 = vpack.c.b16 %v547, %v546
    %v558 = vpack.c.b16 %v549, %v548
    %v559 = vpack.c.b16 %v551, %v550
    %568 = vmatprep.subr.bf16.mxu0 0
    %569 = vmatpush1.bf16.msra.mxu0 %v552
    %570 = vmatprep.subr.bf16.mxu0 0
    %571 = vmatpush1.bf16.msra.mxu0 %v553
    %572 = vmatprep.subr.bf16.mxu0 0
    %573 = vmatpush1.bf16.msra.mxu0 %v554
    %574 = vmatprep.subr.bf16.mxu0 0
    %575 = vmatpush1.bf16.msra.mxu0 %v555
    %576 = vmatprep.subr.bf16.mxu0 0
    %577 = vmatpush1.bf16.msra.mxu0 %v556
    %578 = vmatprep.subr.bf16.mxu0 0
    %579 = vmatpush1.bf16.msra.mxu0 %v557
    %580 = vmatprep.subr.bf16.mxu0 0
    %581 = vmatpush1.bf16.msra.mxu0 %v558
    %582 = vmatprep.subr.bf16.mxu0 0
    %583 = vmatpush1.bf16.msra.mxu0 %v559
    %584 = vmatprep.subr.bf16.mxu0 0
    %585 = vmatpush1.bf16.msra.mxu0 0
    %586 = vmatprep.subr.bf16.mxu0 0
    %587 = vmatpush1.bf16.msra.mxu0 0
    %588 = vmatprep.subr.bf16.mxu0 0
    %589 = vmatpush1.bf16.msra.mxu0 0
    %590 = vmatprep.subr.bf16.mxu0 0
    %591 = vmatpush1.bf16.msra.mxu0 0
    %592 = vmatprep.subr.bf16.mxu0 0
    %593 = vmatpush1.bf16.msra.mxu0 0
    %594 = vmatprep.subr.bf16.mxu0 0
    %595 = vmatpush1.bf16.msra.mxu0 0
    %596 = vmatprep.subr.bf16.mxu0 0
    %597 = vmatpush1.bf16.msra.mxu0 0
    %598 = vmatprep.subr.bf16.mxu0 0
    %599 = vmatpush1.bf16.msra.mxu0 0
    %600 = vmatprep.mubr.bf16.mxu0 0
    %601 = vmatmul.mubr.bf16.gmra.mrb[0].mxu0 %v496
    %v602 = vpop.f32.mrb[0].mxu0
    %v603 = vadd.f32 %v518, %v602
    %v604 = vpop.f32.mrb[0].mxu0
    %v605 = vpop.f32.mrb[0].mxu0
    %v606 = vpop.f32.mrb[0].mxu0
    %607 = vdwg.mxu0
    %v608 = vpack.c.bf16 %v603, %v603
    %609 = vst [vmem:[#allocation11] sm:$0x1] %v608
    // Predicated region
    $region58: #{tpu_custom_call.1} parent=1 // pred_check
      _
    $region59: #{tpu_custom_call.1} parent=1 // pred_check_branch
      %611 = sbr.rel (0) target = $region61
    $region60: #{tpu_custom_call.1} parent=1 // pred_region
      %s613 = ssub.s32 16, 16
      %614 = vsyncadd [#allocation4], %s613
      %s616 = sshll.u32 [#allocation11], 4
      %s617 = int_to_ptr.vmem [resolvable:$true] %s616
      %619 = dma.vmem_to_hbm [thread:$0]  %s617, 16, %s9, [#allocation4]
    $region61: #{tpu_custom_call.1} parent=1 // pred_fallthru
      _
    // Predicated region
    $region62: #{tpu_custom_call.1} parent=1 // pred_check
      _
    $region63: #{tpu_custom_call.1} parent=1 // pred_check_branch
      %621 = sbr.rel (0) target = $region65
    $region64: #{tpu_custom_call.1} parent=1 // pred_region
      %622 = dma.done [#allocation4], 16
    $region65: #{tpu_custom_call.1} parent=1 // pred_fallthru
      _
    %623 = vsyncpa [#allocation3], 1
    %624 = vsyncpa [#allocation6], 1
    %625 = vsyncpa [#allocation9], 1
    %626 = vsyncpa [#allocation4], 1

</llo_original>
